<compile_context>
chip_gen: v7x
topology: tpu7x:2x2x1
jax: 0.10.0
libtpu: 0.0.40
codegen_flags: <defaults>
</compile_context>

<pallas_src>
import jax
import jax.numpy as jnp
from jax.experimental import pallas as pl
from jax.experimental.pallas import tpu as pltpu

# ---- fixed, small hyper-params consistent with the module ------------------
ACTIONS = 4
LAYERS_SIZES = [32, 32, 8]          # layers_sizes
STATE = LAYERS_SIZES[-1]            # state_size = 8
DONE_LAYERS = [64, 10, 1]           # done_network hidden sizes
FUTURE_VARS = (0.0, 1.0)
SA = STATE + ACTIONS                # 12 : width of state_and_actions
IN_SIZE = SA + 1                    # 13 : variant column + state + actions
LANES = 128
OUT_LANES = 32                      # narrow lane-dense output row
V1_OFF = 16                         # variant-1 results start at lane 16
TB_MAX = 2048

# ---- packed parameter slab layout (rows; every segment start 8-aligned) ----
R_W0SA = 0          # w0[1:, :]                         (12, 32)
R_W0VAR = 16        # w0[0, :]                          (1, 32)
R_B0 = 24           # b0                                (1, 32)
R_W1 = 32           # w1                                (32, 32)
R_B1 = 64           # b1                                (1, 32)
R_W2B = 72          # [w2 @ lanes 0:8 | w2@dw0 @ 64:128](32, 128)
R_B2B = 104         # [b2 @ lanes 0:8 | b2@dw0+db0 ...] (1, 128)
R_DW1 = 112         # dw1 padded to 16 cols             (64, 16)
R_DB1 = 176         # db1 padded, lane 10 = 1           (1, 16)
R_DW2R = 184        # [dw2 | db2]                       (1, 16)
P_ROWS = 192


def predictor_kernel(sa_ref, p_ref, out_ref):
    tb = sa_ref.shape[0]
    sa = sa_ref[...]                                                    # (tb, 12)

    # layer 0 -- one shared matmul; the variant column is handled by adding
    # w0[0, :] for variant 1 (variant 0 contributes nothing).
    pre0 = (jnp.dot(sa, p_ref[R_W0SA:R_W0SA + SA, 0:32],
                    preferred_element_type=jnp.float32)
            + p_ref[R_B0:R_B0 + 1, 0:32])
    h0 = jnp.concatenate(
        [jnp.maximum(pre0, 0.0),
         jnp.maximum(pre0 + p_ref[R_W0VAR:R_W0VAR + 1, 0:32], 0.0)],
        axis=0)                                                         # (2tb, 32)

    # layer 1 -- single matmul over both variant stacks
    h1 = jnp.maximum(
        jnp.dot(h0, p_ref[R_W1:R_W1 + 32, 0:32],
                preferred_element_type=jnp.float32)
        + p_ref[R_B1:R_B1 + 1, 0:32], 0.0)                              # (2tb, 32)

    # fused [layer 2 (pred) | folded done-layer-0] -- single matmul
    #   relu(pred @ dw0 + db0) == relu(h1 @ (w2@dw0) + (b2@dw0 + db0))
    res = (jnp.dot(h1, p_ref[R_W2B:R_W2B + 32, :],
                   preferred_element_type=jnp.float32)
           + p_ref[R_B2B:R_B2B + 1, :])                                 # (2tb, 128)
    pred = res[:, 0:STATE]                                              # (2tb, 8)
    d0 = jnp.maximum(res[:, 64:128], 0.0)                               # (2tb, 64)

    # done layer 1 (10 cols padded to 16; lane 10 is forced to 1.0 post-relu to
    # carry the final bias db2)
    d1 = jnp.maximum(
        jnp.dot(d0, p_ref[R_DW1:R_DW1 + 64, 0:16],
                preferred_element_type=jnp.float32)
        + p_ref[R_DB1:R_DB1 + 1, 0:16], 0.0)                            # (2tb, 16)

    # done layer 2: K=10, N=1 matmul replaced by a VPU multiply + lane reduce
    done = jax.nn.sigmoid(
        jnp.sum(d1 * p_ref[R_DW2R:R_DW2R + 1, 0:16],
                axis=-1, keepdims=True))                                # (2tb, 1)

    # compose one lane-dense (tb, 32) row and store it once
    fill = jnp.zeros((tb, V1_OFF - STATE - 1), jnp.float32)             # (tb, 7)
    row = jnp.concatenate(
        [pred[:tb], done[:tb], fill, pred[tb:], done[tb:], fill],
        axis=-1)                                                        # (tb, 32)
    out_ref[...] = row


# ---------------------------------------------------------------------------
def init_mlp(key, sizes):
    """Deterministic uniform(-1/sqrt(fan_in), 1/sqrt(fan_in)) init, (in, out) weights."""
    params = []
    for fan_in, fan_out in zip(sizes[:-1], sizes[1:]):
        key, kw, kb = jax.random.split(key, 3)
        bound = 1.0 / jnp.sqrt(jnp.float32(fan_in))
        w = jax.random.uniform(kw, (fan_in, fan_out), jnp.float32, -bound, bound)
        b = jax.random.uniform(kb, (1, fan_out), jnp.float32, -bound, bound)
        params.append((w, b))
    return params, key


def pack_params(net_params, done_params):
    """Fold done layer 0 into network layer 2 and pack everything into one slab."""
    (w0, b0), (w1, b1), (w2, b2) = net_params
    (dw0, db0), (dw1, db1), (dw2, db2) = done_params

    slab = jnp.zeros((P_ROWS, LANES), jnp.float32)
    slab = slab.at[R_W0SA:R_W0SA + SA, 0:32].set(w0[1:, :])
    slab = slab.at[R_W0VAR, 0:32].set(w0[0, :])
    slab = slab.at[R_B0, 0:32].set(b0[0])
    slab = slab.at[R_W1:R_W1 + 32, 0:32].set(w1)
    slab = slab.at[R_B1, 0:32].set(b1[0])
    # fused [w2 | folded done-layer-0]; w2d parked at lanes 64:128 (64-aligned slice)
    slab = slab.at[R_W2B:R_W2B + 32, 0:STATE].set(w2)
    slab = slab.at[R_W2B:R_W2B + 32, 64:128].set(w2 @ dw0)
    slab = slab.at[R_B2B, 0:STATE].set(b2[0])
    slab = slab.at[R_B2B, 64:128].set((b2 @ dw0 + db0)[0])
    # done layer 1 padded to 16 lanes; lane 10 post-relu == 1.0 (bias carrier)
    slab = slab.at[R_DW1:R_DW1 + 64, 0:10].set(dw1)
    slab = slab.at[R_DB1, 0:10].set(db1[0])
    slab = slab.at[R_DB1, 10].set(1.0)
    # done layer 2 as a lane-reduction row: lanes 0..9 = dw2, lane 10 = db2
    slab = slab.at[R_DW2R, 0:10].set(dw2[:, 0])
    slab = slab.at[R_DW2R, 10].set(db2[0, 0])
    return slab


def _round_up(x, m):
    return (x + m - 1) // m * m


def predictor_forward(state_and_actions, param_slab):
    b = state_and_actions.shape[0]
    bpad = _round_up(max(b, 8), 8)
    tb = min(TB_MAX, bpad)
    # v7x megacore: when the batch is big, guarantee >= 2 grid steps so the
    # "parallel" row axis can be sharded across both TensorCores.
    if bpad > 512:
        tb = min(tb, _round_up(-(-bpad // 2), 8))
    bpad = _round_up(bpad, tb)

    sa = state_and_actions
    if sa.dtype != jnp.float32:
        sa = sa.astype(jnp.float32)
    if bpad != b:
        sa = jnp.pad(sa, ((0, bpad - b), (0, 0)))

    flops = (2 * bpad * SA * 32
             + 2 * (2 * bpad) * (32 * 32 + 32 * LANES + 64 * 16 + 16))
    bytes_accessed = bpad * SA * 4 + bpad * OUT_LANES * 4 + P_ROWS * LANES * 4
    cost = pl.CostEstimate(flops=flops, transcendentals=2 * bpad,
                           bytes_accessed=bytes_accessed)

    out = pl.pallas_call(
        predictor_kernel,
        out_shape=jax.ShapeDtypeStruct((bpad, OUT_LANES), jnp.float32),
        grid=(bpad // tb,),
        in_specs=[
            pl.BlockSpec((tb, SA), lambda i: (i, 0)),
            pl.BlockSpec((P_ROWS, LANES), lambda i: (0, 0)),   # resident weights
        ],
        out_specs=pl.BlockSpec((tb, OUT_LANES), lambda i: (i, 0)),
        compiler_params=pltpu.CompilerParams(dimension_semantics=("parallel",)),
        cost_estimate=cost,
    )(sa, param_slab)

    # lanes 0:8 / 8 = variant-0 pred / done; lanes 16:24 / 24 = variant-1
    predicted_states = jnp.stack(
        [out[:b, 0:STATE], out[:b, V1_OFF:V1_OFF + STATE]], axis=1)      # (B, 2, S)
    done = jnp.stack(
        [out[:b, STATE:STATE + 1],
         out[:b, V1_OFF + STATE:V1_OFF + STATE + 1]], axis=1)            # (B, 2, 1)
    return predicted_states, done


# ---------------------------------------------------------------------------
def _crate_all_variants(state_and_actions):
    b = state_and_actions.shape[0]
    variants = []
    for var in FUTURE_VARS:
        col = jnp.full((b, 1), var, dtype=state_and_actions.dtype)
        variants.append(jnp.concatenate([col, state_and_actions], axis=1))
    return jnp.stack(variants, axis=1)            # (B, 2, IN_SIZE)


def _reference_forward(state_and_actions, net_params, done_params):
    """Pure-JAX reference (un-folded) for sanity checking."""
    h = _crate_all_variants(state_and_actions)
    for i, (w, bias) in enumerate(net_params):
        h = h @ w + bias
        if i < len(net_params) - 1:
            h = jnp.maximum(h, 0.0)
    pred = h
    d = pred
    for i, (w, bias) in enumerate(done_params):
        d = d @ w + bias
        if i < len(done_params) - 1:
            d = jnp.maximum(d, 0.0)
    return pred, jax.nn.sigmoid(d)


if __name__ == "__main__":
    key = jax.random.PRNGKey(0)

    # Deterministic synthetic parameters (module __init__ shapes).
    net_params, key = init_mlp(key, [IN_SIZE] + LAYERS_SIZES)          # 13 -> 32 -> 32 -> 8
    done_params, key = init_mlp(key, [STATE] + DONE_LAYERS)            # 8 -> 64 -> 10 -> 1
    param_slab = pack_params(net_params, done_params)

    # forward input: state_and_actions = cat(prev_states, actions) -> (B, S + A)
    B = 2
    key, kx = jax.random.split(key)
    state_and_actions = jax.random.normal(kx, (B, SA), jnp.float32)

    pred, done = predictor_forward(state_and_actions, param_slab)
    pred, done = jax.block_until_ready((pred, done))

    ref_pred, ref_done = _reference_forward(state_and_actions, net_params, done_params)
    assert pred.shape == (B, len(FUTURE_VARS), STATE)
    assert done.shape == (B, len(FUTURE_VARS), 1)
    assert jnp.allclose(pred, ref_pred, atol=2e-5, rtol=1e-4)
    assert jnp.allclose(done, ref_done, atol=2e-5, rtol=1e-4)

    print("KERNEL_OK")
</pallas_src>

<mosaic_0001>
module attributes {stable_mosaic.version = 11 : i64} {
  func.func @predictor_kernel(%arg0: i32, %arg1: memref<8x12xf32, #tpu.memory_space<vmem>>, %arg2: memref<192x128xf32, #tpu.memory_space<vmem>>, %arg3: memref<8x32xf32, #tpu.memory_space<vmem>>) attributes {dimension_semantics = [#tpu.dimension_semantics<parallel>], iteration_bounds = array<i64: 1>, scalar_prefetch = 0 : i64, scratch_operands = 0 : i64, tpu.core_type = #tpu.core_type<tc>, window_params = [{transform_indices = @transform_0, window_bounds = array<i64: 8, 12>}, {pipeline_mode = #tpu.pipeline_mode<synchronous>, transform_indices = @transform_1, window_bounds = array<i64: 192, 128>}, {transform_indices = @transform_2, window_bounds = array<i64: 8, 32>}]} {
    %c0 = arith.constant 0 : index
    %c0_0 = arith.constant 0 : index
    %0 = vector.load %arg1[%c0, %c0_0] : memref<8x12xf32, #tpu.memory_space<vmem>>, vector<8x12xf32>
    %c0_1 = arith.constant 0 : index
    %c0_2 = arith.constant 0 : index
    %1 = vector.load %arg2[%c0_1, %c0_2] : memref<192x128xf32, #tpu.memory_space<vmem>>, vector<12x32xf32>
    %cst = arith.constant dense<0.000000e+00> : vector<8x32xf32>
    %2 = tpu.matmul %0, %1, %cst {dimension_numbers = #tpu.dot_dimension_numbers<[1], [0], [0], [1], [0, 0, 1, 1], [], []>} : vector<8x12xf32>, vector<12x32xf32>, vector<8x32xf32> -> vector<8x32xf32>
    %c24 = arith.constant 24 : index
    %c0_3 = arith.constant 0 : index
    %3 = vector.load %arg2[%c24, %c0_3] : memref<192x128xf32, #tpu.memory_space<vmem>>, vector<1x32xf32>
    %4 = vector.broadcast %3 : vector<1x32xf32> to vector<8x32xf32>
    %5 = arith.addf %2, %4 : vector<8x32xf32>
    %cst_4 = arith.constant 0.000000e+00 : f32
    %6 = vector.broadcast %cst_4 : f32 to vector<8x32xf32>
    %7 = arith.maximumf %5, %6 : vector<8x32xf32>
    %c16 = arith.constant 16 : index
    %c0_5 = arith.constant 0 : index
    %8 = vector.load %arg2[%c16, %c0_5] : memref<192x128xf32, #tpu.memory_space<vmem>>, vector<1x32xf32>
    %9 = vector.broadcast %8 : vector<1x32xf32> to vector<8x32xf32>
    %10 = arith.addf %5, %9 : vector<8x32xf32>
    %cst_6 = arith.constant 0.000000e+00 : f32
    %11 = vector.broadcast %cst_6 : f32 to vector<8x32xf32>
    %12 = arith.maximumf %10, %11 : vector<8x32xf32>
    %13 = tpu.concatenate %7, %12 in 0 : vector<8x32xf32>, vector<8x32xf32> -> vector<16x32xf32>
    %c32 = arith.constant 32 : index
    %c0_7 = arith.constant 0 : index
    %14 = vector.load %arg2[%c32, %c0_7] : memref<192x128xf32, #tpu.memory_space<vmem>>, vector<32x32xf32>
    %cst_8 = arith.constant dense<0.000000e+00> : vector<16x32xf32>
    %15 = tpu.matmul %13, %14, %cst_8 {dimension_numbers = #tpu.dot_dimension_numbers<[1], [0], [0], [1], [0, 0, 1, 1], [], []>} : vector<16x32xf32>, vector<32x32xf32>, vector<16x32xf32> -> vector<16x32xf32>
    %c64 = arith.constant 64 : index
    %c0_9 = arith.constant 0 : index
    %16 = vector.load %arg2[%c64, %c0_9] : memref<192x128xf32, #tpu.memory_space<vmem>>, vector<1x32xf32>
    %17 = vector.broadcast %16 : vector<1x32xf32> to vector<16x32xf32>
    %18 = arith.addf %15, %17 : vector<16x32xf32>
    %cst_10 = arith.constant 0.000000e+00 : f32
    %19 = vector.broadcast %cst_10 : f32 to vector<16x32xf32>
    %20 = arith.maximumf %18, %19 : vector<16x32xf32>
    %c72 = arith.constant 72 : index
    %c0_11 = arith.constant 0 : index
    %21 = vector.load %arg2[%c72, %c0_11] : memref<192x128xf32, #tpu.memory_space<vmem>>, vector<32x128xf32>
    %cst_12 = arith.constant dense<0.000000e+00> : vector<16x128xf32>
    %22 = tpu.matmul %20, %21, %cst_12 {dimension_numbers = #tpu.dot_dimension_numbers<[1], [0], [0], [1], [0, 0, 1, 1], [], []>} : vector<16x32xf32>, vector<32x128xf32>, vector<16x128xf32> -> vector<16x128xf32>
    %c104 = arith.constant 104 : index
    %c0_13 = arith.constant 0 : index
    %23 = vector.load %arg2[%c104, %c0_13] : memref<192x128xf32, #tpu.memory_space<vmem>>, vector<1x128xf32>
    %24 = vector.broadcast %23 : vector<1x128xf32> to vector<16x128xf32>
    %25 = arith.addf %22, %24 : vector<16x128xf32>
    %26 = vector.extract_strided_slice %25 {offsets = [0, 0], sizes = [16, 8], strides = [1, 1]} : vector<16x128xf32> to vector<16x8xf32>
    %27 = vector.extract_strided_slice %25 {offsets = [0, 64], sizes = [16, 64], strides = [1, 1]} : vector<16x128xf32> to vector<16x64xf32>
    %cst_14 = arith.constant 0.000000e+00 : f32
    %28 = vector.broadcast %cst_14 : f32 to vector<16x64xf32>
    %29 = arith.maximumf %27, %28 : vector<16x64xf32>
    %c112 = arith.constant 112 : index
    %c0_15 = arith.constant 0 : index
    %30 = vector.load %arg2[%c112, %c0_15] : memref<192x128xf32, #tpu.memory_space<vmem>>, vector<64x16xf32>
    %cst_16 = arith.constant dense<0.000000e+00> : vector<16x16xf32>
    %31 = tpu.matmul %29, %30, %cst_16 {dimension_numbers = #tpu.dot_dimension_numbers<[1], [0], [0], [1], [0, 0, 1, 1], [], []>} : vector<16x64xf32>, vector<64x16xf32>, vector<16x16xf32> -> vector<16x16xf32>
    %c176 = arith.constant 176 : index
    %c0_17 = arith.constant 0 : index
    %32 = vector.load %arg2[%c176, %c0_17] : memref<192x128xf32, #tpu.memory_space<vmem>>, vector<1x16xf32>
    %33 = vector.broadcast %32 : vector<1x16xf32> to vector<16x16xf32>
    %34 = arith.addf %31, %33 : vector<16x16xf32>
    %cst_18 = arith.constant 0.000000e+00 : f32
    %35 = vector.broadcast %cst_18 : f32 to vector<16x16xf32>
    %36 = arith.maximumf %34, %35 : vector<16x16xf32>
    %c184 = arith.constant 184 : index
    %c0_19 = arith.constant 0 : index
    %37 = vector.load %arg2[%c184, %c0_19] : memref<192x128xf32, #tpu.memory_space<vmem>>, vector<1x16xf32>
    %38 = vector.broadcast %37 : vector<1x16xf32> to vector<16x16xf32>
    %39 = arith.mulf %36, %38 : vector<16x16xf32>
    %cst_20 = arith.constant dense<0.000000e+00> : vector<16xf32>
    %40 = vector.multi_reduction <add>, %39, %cst_20 [1] : vector<16x16xf32> to vector<16xf32>
    %41 = vector.shape_cast %40 : vector<16xf32> to vector<16x1xf32>
    %42 = arith.negf %41 : vector<16x1xf32>
    %43 = math.exp %42 : vector<16x1xf32>
    %cst_21 = arith.constant 1.000000e+00 : f32
    %44 = vector.broadcast %cst_21 : f32 to vector<16x1xf32>
    %45 = arith.addf %44, %43 : vector<16x1xf32>
    %46 = arith.divf %44, %45 : vector<16x1xf32>
    %cst_22 = arith.constant 0.000000e+00 : f32
    %47 = vector.broadcast %cst_22 : f32 to vector<8x7xf32>
    %48 = vector.extract_strided_slice %26 {offsets = [0, 0], sizes = [8, 8], strides = [1, 1]} : vector<16x8xf32> to vector<8x8xf32>
    %49 = vector.extract_strided_slice %46 {offsets = [0, 0], sizes = [8, 1], strides = [1, 1]} : vector<16x1xf32> to vector<8x1xf32>
    %50 = vector.extract_strided_slice %26 {offsets = [8, 0], sizes = [8, 8], strides = [1, 1]} : vector<16x8xf32> to vector<8x8xf32>
    %51 = vector.extract_strided_slice %46 {offsets = [8, 0], sizes = [8, 1], strides = [1, 1]} : vector<16x1xf32> to vector<8x1xf32>
    %52 = tpu.concatenate %48, %49, %47, %50, %51, %47 in 1 : vector<8x8xf32>, vector<8x1xf32>, vector<8x7xf32>, vector<8x8xf32>, vector<8x1xf32>, vector<8x7xf32> -> vector<8x32xf32>
    %c0_23 = arith.constant 0 : index
    %c0_24 = arith.constant 0 : index
    %53 = vector.load %arg3[%c0_23, %c0_24] : memref<8x32xf32, #tpu.memory_space<vmem>>, vector<8x32xf32>
    tpu.vector_store %arg3[%c0_23, %c0_24], %52 {strides = array<i32>} : memref<8x32xf32, #tpu.memory_space<vmem>>, vector<8x32xf32>,
    return
  }
  func.func @transform_0(%arg0: i32) -> (i32, i32) {
    %c0_i32 = arith.constant 0 : i32
    %c0_i32_0 = arith.constant 0 : i32
    return %arg0, %c0_i32 : i32, i32
  }
  func.func @transform_1(%arg0: i32) -> (i32, i32) {
    %c0_i32 = arith.constant 0 : i32
    %c0_i32_0 = arith.constant 0 : i32
    %c0_i32_1 = arith.constant 0 : i32
    return %c0_i32, %c0_i32_0 : i32, i32
  }
  func.func @transform_2(%arg0: i32) -> (i32, i32) {
    %c0_i32 = arith.constant 0 : i32
    %c0_i32_0 = arith.constant 0 : i32
    return %arg0, %c0_i32 : i32, i32
  }
}

</mosaic_0001>

<llo_original>
// kernel: tpu_custom_call.1
$region0: #{tpu_custom_call.1}
  #allocation0 [shape = 'u32[]', space=smem, size = 0x4, offset = 0x4, fixed_abs, tag = 'smem constant byte address 0x4 - core index']
  #allocation1 [shape = 'u32[144,128]{1,0:T(1,128)}', space=vmem, size = 0x12000, scoped, tag = 'internal scratch']
  %s0 = inlined_call_operand.hbm [shape: f32[8,12], index: 0, kind: input, shape index: {}]
  %s1 = inlined_call_operand.hbm [shape: f32[192,128], index: 1, kind: input, shape index: {}]
  %s2 = inlined_call_operand.hbm [shape: f32[8,32], index: 2, kind: output, shape index: {}]
  %s3 = sld [smem:[#allocation0]]
  $region26: #{tpu_custom_call.1} parent=0
    _
  %s5 = ssub.s32 1, %s3
  %s6 = scalar_select 0, %s5, %s3
  $region1: #{tpu_custom_call.1} parent=0
    #allocation2 [shape = 'u8[4096]{0}', space=vmem, size = 0x1000, scoped, tag = 'input window, operand 0, single buffered']
    #allocation3 [shape = 's32[1]{0}', space=sflag, size = 0x4, scoped, tag = 'scoped memory for tpu_custom_call.1']
    #allocation4 [shape = 's32[1]{0}', space=sflag, size = 0x4, scoped, tag = 'scoped memory for tpu_custom_call.1']
    #allocation5 [shape = 'u8[98304]{0}', space=vmem, size = 0x18000, scoped, tag = 'input window, operand 1, single buffered']
    #allocation6 [shape = 's32[1]{0}', space=sflag, size = 0x4, scoped, tag = 'scoped memory for tpu_custom_call.1']
    #allocation7 [shape = 'u8[4096]{0}', space=vmem, size = 0x1000, scoped, tag = 'output window, operand 0, single buffered']
    %7 = vsyncpa [#allocation3], 0
    %8 = vsyncpa [#allocation6], 0
    %9 = vsyncpa [#allocation4], 0
    // Predicated region
    $region2: #{tpu_custom_call.1} parent=1 // pred_check
      _
    $region3: #{tpu_custom_call.1} parent=1 // pred_check_branch
      %11 = sbr.rel (0) target = $region5
    $region4: #{tpu_custom_call.1} parent=1 // pred_region
      %s13 = ssub.s32 128, 128
      %14 = vsyncadd [#allocation3], %s13
      %s16 = sshll.u32 [#allocation2], 4
      %s17 = int_to_ptr.vmem [resolvable:$true] %s16
      %19 = dma.hbm_to_vmem [thread:$0]  %s0, 128, %s17, [#allocation3]
    $region5: #{tpu_custom_call.1} parent=1 // pred_fallthru
      _
    // Predicated region
    $region6: #{tpu_custom_call.1} parent=1 // pred_check
      _
    $region7: #{tpu_custom_call.1} parent=1 // pred_check_branch
      %21 = sbr.rel (0) target = $region9
    $region8: #{tpu_custom_call.1} parent=1 // pred_region
      %s23 = ssub.s32 3072, 3072
      %24 = vsyncadd [#allocation6], %s23
      %s25 = sshll.u32 [#allocation5], 4
      %s26 = int_to_ptr.vmem [resolvable:$true] %s25
      %31 = dma.hbm_to_vmem [thread:$0]  %s1, 3072, %s26, [#allocation6], 128, 128, 8
    $region9: #{tpu_custom_call.1} parent=1 // pred_fallthru
      _
    // Predicated region
    $region10: #{tpu_custom_call.1} parent=1 // pred_check
      _
    $region11: #{tpu_custom_call.1} parent=1 // pred_check_branch
      %33 = sbr.rel (0) target = $region13
    $region12: #{tpu_custom_call.1} parent=1 // pred_region
      %34 = dma.done [#allocation3], 128
    $region13: #{tpu_custom_call.1} parent=1 // pred_fallthru
      _
    // Predicated region
    $region14: #{tpu_custom_call.1} parent=1 // pred_check
      _
    $region15: #{tpu_custom_call.1} parent=1 // pred_check_branch
      %36 = sbr.rel (0) target = $region17
    $region16: #{tpu_custom_call.1} parent=1 // pred_region
      %37 = dma.done [#allocation6], 3072
    $region17: #{tpu_custom_call.1} parent=1 // pred_fallthru
      _
    %v38 = vld [vmem:[#allocation2] sm:$0xff]
    %v39 = vld [vmem:[#allocation5] sm:$0xff]
    %v40 = vld [vmem:[#allocation5 + $0x8] sm:$0xf]
    %v41 = vld [vmem:[#allocation5 + $0x18] sm:$0x1]
    %v42 = vlaneseq
    %v43 = vshrl.u32 %v42, 7
    %v44 = vsub.s32 0, %v43
    %v45 = vrot.slane %v41, %v44
    %vm46 = vcmask 97280
    %v48 = vsel %vm46, %v38, 0
    %vm50 = vcmask 1043456
    %v52 = vsel %vm50, %v40, 0
    %54 = vmatprep.subr.mxu0 0.0
    %55 = vmatpush1.msra.mxu0 %v39
    %56 = vmatprep.subr.mxu0 0.0
    %57 = vmatpush1.msra.mxu0 %v52
    %58 = vmatprep.subr.mxu0 0.0
    %59 = vmatpush1.msra.mxu0 0.0
    %60 = vmatprep.subr.mxu0 0.0
    %61 = vmatpush1.msra.mxu0 0.0
    %62 = vmatprep.subr.mxu0 0.0
    %63 = vmatpush1.msra.mxu0 0.0
    %64 = vmatprep.subr.mxu0 0.0
    %65 = vmatpush1.msra.mxu0 0.0
    %66 = vmatprep.subr.mxu0 0.0
    %67 = vmatpush1.msra.mxu0 0.0
    %68 = vmatprep.subr.mxu0 0.0
    %69 = vmatpush1.msra.mxu0 0.0
    %70 = vmatprep.subr.mxu0 0.0
    %71 = vmatpush1.msra.mxu0 0.0
    %72 = vmatprep.subr.mxu0 0.0
    %73 = vmatpush1.msra.mxu0 0.0
    %74 = vmatprep.subr.mxu0 0.0
    %75 = vmatpush1.msra.mxu0 0.0
    %76 = vmatprep.subr.mxu0 0.0
    %77 = vmatpush1.msra.mxu0 0.0
    %78 = vmatprep.subr.mxu0 0.0
    %79 = vmatpush1.msra.mxu0 0.0
    %80 = vmatprep.subr.mxu0 0.0
    %81 = vmatpush1.msra.mxu0 0.0
    %82 = vmatprep.subr.mxu0 0.0
    %83 = vmatpush1.msra.mxu0 0.0
    %84 = vmatprep.subr.mxu0 0.0
    %85 = vmatpush1.msra.mxu0 0.0
    %86 = vmatprep.subr.mxu0 0.0
    %87 = vmatpush1.msra.mxu0 0.0
    %88 = vmatprep.subr.mxu0 0.0
    %89 = vmatpush1.msra.mxu0 0.0
    %90 = vmatprep.subr.mxu0 0.0
    %91 = vmatpush1.msra.mxu0 0.0
    %92 = vmatprep.subr.mxu0 0.0
    %93 = vmatpush1.msra.mxu0 0.0
    %94 = vmatprep.subr.mxu0 0.0
    %95 = vmatpush1.msra.mxu0 0.0
    %96 = vmatprep.subr.mxu0 0.0
    %97 = vmatpush1.msra.mxu0 0.0
    %98 = vmatprep.subr.mxu0 0.0
    %99 = vmatpush1.msra.mxu0 0.0
    %100 = vmatprep.subr.mxu0 0.0
    %101 = vmatpush1.msra.mxu0 0.0
    %102 = vmatprep.subr.mxu0 0.0
    %103 = vmatpush1.msra.mxu0 0.0
    %104 = vmatprep.subr.mxu0 0.0
    %105 = vmatpush1.msra.mxu0 0.0
    %106 = vmatprep.subr.mxu0 0.0
    %107 = vmatpush1.msra.mxu0 0.0
    %108 = vmatprep.subr.mxu0 0.0
    %109 = vmatpush1.msra.mxu0 0.0
    %110 = vmatprep.subr.mxu0 0.0
    %111 = vmatpush1.msra.mxu0 0.0
    %112 = vmatprep.subr.mxu0 0.0
    %113 = vmatpush1.msra.mxu0 0.0
    %114 = vmatprep.subr.mxu0 0.0
    %115 = vmatpush1.msra.mxu0 0.0
    %116 = vmatprep.subr.mxu0 0.0
    %117 = vmatpush1.msra.mxu0 0.0
    %118 = vmatprep.mubr.f32.mxu0 0.0
    %119 = vmatmul.mubr.f32.gmra.mrb[0].mxu0 %v48
    %v120 = vpop.f32.mrb[0].mxu0
    %v121 = vadd.f32 %v45, %v120
    %v122 = vpop.f32.mrb[0].mxu0
    %123 = vdwg.mxu0
    %v124 = vmax.f32 %v121, 0.0
    %v125 = vld [vmem:[#allocation5 + $0x10] sm:$0x1]
    %v126 = vlaneseq
    %v127 = vshrl.u32 %v126, 7
    %v128 = vsub.s32 0, %v127
    %v129 = vrot.slane %v125, %v128
    %v130 = vadd.f32 %v121, %v129
    %v131 = vmax.f32 %v130, 0.0
    %v132 = vld [vmem:[#allocation5 + $0x20] sm:$0xff]
    %v133 = vld [vmem:[#allocation5 + $0x28] sm:$0xff]
    %v134 = vld [vmem:[#allocation5 + $0x30] sm:$0xff]
    %v135 = vld [vmem:[#allocation5 + $0x38] sm:$0xff]
    %v136 = vld [vmem:[#allocation5 + $0x40] sm:$0x1]
    %v137 = vlaneseq
    %v138 = vshrl.u32 %v137, 7
    %v139 = vsub.s32 0, %v138
    %v140 = vrot.slane %v136, %v139
    %vm141 = vcmask 261120
    %v143 = vsel %vm141, %v124, 0
    %v146 = vsel %vm141, %v131, 0
    %148 = vmatprep.subr.mxu0 0.0
    %149 = vmatpush1.msra.mxu0 %v132
    %150 = vmatprep.subr.mxu0 0.0
    %151 = vmatpush1.msra.mxu0 %v133
    %152 = vmatprep.subr.mxu0 0.0
    %153 = vmatpush1.msra.mxu0 %v134
    %154 = vmatprep.subr.mxu0 0.0
    %155 = vmatpush1.msra.mxu0 %v135
    %156 = vmatprep.subr.mxu0 0.0
    %157 = vmatpush1.msra.mxu0 0.0
    %158 = vmatprep.subr.mxu0 0.0
    %159 = vmatpush1.msra.mxu0 0.0
    %160 = vmatprep.subr.mxu0 0.0
    %161 = vmatpush1.msra.mxu0 0.0
    %162 = vmatprep.subr.mxu0 0.0
    %163 = vmatpush1.msra.mxu0 0.0
    %164 = vmatprep.subr.mxu0 0.0
    %165 = vmatpush1.msra.mxu0 0.0
    %166 = vmatprep.subr.mxu0 0.0
    %167 = vmatpush1.msra.mxu0 0.0
    %168 = vmatprep.subr.mxu0 0.0
    %169 = vmatpush1.msra.mxu0 0.0
    %170 = vmatprep.subr.mxu0 0.0
    %171 = vmatpush1.msra.mxu0 0.0
    %172 = vmatprep.subr.mxu0 0.0
    %173 = vmatpush1.msra.mxu0 0.0
    %174 = vmatprep.subr.mxu0 0.0
    %175 = vmatpush1.msra.mxu0 0.0
    %176 = vmatprep.subr.mxu0 0.0
    %177 = vmatpush1.msra.mxu0 0.0
    %178 = vmatprep.subr.mxu0 0.0
    %179 = vmatpush1.msra.mxu0 0.0
    %180 = vmatprep.subr.mxu0 0.0
    %181 = vmatpush1.msra.mxu0 0.0
    %182 = vmatprep.subr.mxu0 0.0
    %183 = vmatpush1.msra.mxu0 0.0
    %184 = vmatprep.subr.mxu0 0.0
    %185 = vmatpush1.msra.mxu0 0.0
    %186 = vmatprep.subr.mxu0 0.0
    %187 = vmatpush1.msra.mxu0 0.0
    %188 = vmatprep.subr.mxu0 0.0
    %189 = vmatpush1.msra.mxu0 0.0
    %190 = vmatprep.subr.mxu0 0.0
    %191 = vmatpush1.msra.mxu0 0.0
    %192 = vmatprep.subr.mxu0 0.0
    %193 = vmatpush1.msra.mxu0 0.0
    %194 = vmatprep.subr.mxu0 0.0
    %195 = vmatpush1.msra.mxu0 0.0
    %196 = vmatprep.subr.mxu0 0.0
    %197 = vmatpush1.msra.mxu0 0.0
    %198 = vmatprep.subr.mxu0 0.0
    %199 = vmatpush1.msra.mxu0 0.0
    %200 = vmatprep.subr.mxu0 0.0
    %201 = vmatpush1.msra.mxu0 0.0
    %202 = vmatprep.subr.mxu0 0.0
    %203 = vmatpush1.msra.mxu0 0.0
    %204 = vmatprep.subr.mxu0 0.0
    %205 = vmatpush1.msra.mxu0 0.0
    %206 = vmatprep.subr.mxu0 0.0
    %207 = vmatpush1.msra.mxu0 0.0
    %208 = vmatprep.subr.mxu0 0.0
    %209 = vmatpush1.msra.mxu0 0.0
    %210 = vmatprep.subr.mxu0 0.0
    %211 = vmatpush1.msra.mxu0 0.0
    %212 = vmatprep.mubr.f32.mxu0 0.0
    %213 = vmatmul.mubr.f32.gmra.mrb[0].mxu0 %v143
    %v214 = vpop.f32.mrb[0].mxu0
    %v215 = vadd.f32 %v140, %v214
    %v216 = vpop.f32.mrb[0].mxu0
    %217 = vmatprep.mubr.f32.mxu0 0.0
    %218 = vmatmul.mubr.f32.gmra.mrb[0].mxu0 %v146
    %v219 = vpop.f32.mrb[0].mxu0
    %v220 = vadd.f32 %v140, %v219
    %v221 = vpop.f32.mrb[0].mxu0
    %222 = vdwg.mxu0
    %v223 = vmax.f32 %v215, 0.0
    %v224 = vmax.f32 %v220, 0.0
    %v225 = vld [vmem:[#allocation5 + $0x48] sm:$0xff]
    %v226 = vld [vmem:[#allocation5 + $0x50] sm:$0xff]
    %v227 = vld [vmem:[#allocation5 + $0x58] sm:$0xff]
    %v228 = vld [vmem:[#allocation5 + $0x60] sm:$0xff]
    %v229 = vld [vmem:[#allocation5 + $0x68] sm:$0x1]
    %v230 = vlaneseq
    %v231 = vshrl.u32 %v230, 7
    %v232 = vsub.s32 0, %v231
    %v233 = vrot.slane %v229, %v232
    %v235 = vsel %vm141, %v223, 0
    %v238 = vsel %vm141, %v224, 0
    %240 = vmatprep.subr.mxu0 0.0
    %241 = vmatpush1.msra.mxu0 %v225
    %242 = vmatprep.subr.mxu0 0.0
    %243 = vmatpush1.msra.mxu0 %v226
    %244 = vmatprep.subr.mxu0 0.0
    %245 = vmatpush1.msra.mxu0 %v227
    %246 = vmatprep.subr.mxu0 0.0
    %247 = vmatpush1.msra.mxu0 %v228
    %248 = vmatprep.subr.mxu0 0.0
    %249 = vmatpush1.msra.mxu0 0.0
    %250 = vmatprep.subr.mxu0 0.0
    %251 = vmatpush1.msra.mxu0 0.0
    %252 = vmatprep.subr.mxu0 0.0
    %253 = vmatpush1.msra.mxu0 0.0
    %254 = vmatprep.subr.mxu0 0.0
    %255 = vmatpush1.msra.mxu0 0.0
    %256 = vmatprep.subr.mxu0 0.0
    %257 = vmatpush1.msra.mxu0 0.0
    %258 = vmatprep.subr.mxu0 0.0
    %259 = vmatpush1.msra.mxu0 0.0
    %260 = vmatprep.subr.mxu0 0.0
    %261 = vmatpush1.msra.mxu0 0.0
    %262 = vmatprep.subr.mxu0 0.0
    %263 = vmatpush1.msra.mxu0 0.0
    %264 = vmatprep.subr.mxu0 0.0
    %265 = vmatpush1.msra.mxu0 0.0
    %266 = vmatprep.subr.mxu0 0.0
    %267 = vmatpush1.msra.mxu0 0.0
    %268 = vmatprep.subr.mxu0 0.0
    %269 = vmatpush1.msra.mxu0 0.0
    %270 = vmatprep.subr.mxu0 0.0
    %271 = vmatpush1.msra.mxu0 0.0
    %272 = vmatprep.subr.mxu0 0.0
    %273 = vmatpush1.msra.mxu0 0.0
    %274 = vmatprep.subr.mxu0 0.0
    %275 = vmatpush1.msra.mxu0 0.0
    %276 = vmatprep.subr.mxu0 0.0
    %277 = vmatpush1.msra.mxu0 0.0
    %278 = vmatprep.subr.mxu0 0.0
    %279 = vmatpush1.msra.mxu0 0.0
    %280 = vmatprep.subr.mxu0 0.0
    %281 = vmatpush1.msra.mxu0 0.0
    %282 = vmatprep.subr.mxu0 0.0
    %283 = vmatpush1.msra.mxu0 0.0
    %284 = vmatprep.subr.mxu0 0.0
    %285 = vmatpush1.msra.mxu0 0.0
    %286 = vmatprep.subr.mxu0 0.0
    %287 = vmatpush1.msra.mxu0 0.0
    %288 = vmatprep.subr.mxu0 0.0
    %289 = vmatpush1.msra.mxu0 0.0
    %290 = vmatprep.subr.mxu0 0.0
    %291 = vmatpush1.msra.mxu0 0.0
    %292 = vmatprep.subr.mxu0 0.0
    %293 = vmatpush1.msra.mxu0 0.0
    %294 = vmatprep.subr.mxu0 0.0
    %295 = vmatpush1.msra.mxu0 0.0
    %296 = vmatprep.subr.mxu0 0.0
    %297 = vmatpush1.msra.mxu0 0.0
    %298 = vmatprep.subr.mxu0 0.0
    %299 = vmatpush1.msra.mxu0 0.0
    %300 = vmatprep.subr.mxu0 0.0
    %301 = vmatpush1.msra.mxu0 0.0
    %302 = vmatprep.subr.mxu0 0.0
    %303 = vmatpush1.msra.mxu0 0.0
    %304 = vmatprep.mubr.f32.mxu0 0.0
    %305 = vmatmul.mubr.f32.gmra.mrb[0].mxu0 %v235
    %v306 = vpop.f32.mrb[0].mxu0
    %v307 = vadd.f32 %v233, %v306
    %v308 = vpop.f32.mrb[0].mxu0
    %309 = vmatprep.mubr.f32.mxu0 0.0
    %310 = vmatmul.mubr.f32.gmra.mrb[0].mxu0 %v238
    %v311 = vpop.f32.mrb[0].mxu0
    %v312 = vadd.f32 %v233, %v311
    %v313 = vpop.f32.mrb[0].mxu0
    %314 = vdwg.mxu0
    %v315 = vmax.f32 %v307, 0.0
    %v316 = vmax.f32 %v312, 0.0
    %v317 = vld [vmem:[#allocation5 + $0x70] sm:$0xff]
    %v318 = vld [vmem:[#allocation5 + $0x78] sm:$0xff]
    %v319 = vld [vmem:[#allocation5 + $0x80] sm:$0xff]
    %v320 = vld [vmem:[#allocation5 + $0x88] sm:$0xff]
    %v321 = vld [vmem:[#allocation5 + $0x90] sm:$0xff]
    %v322 = vld [vmem:[#allocation5 + $0x98] sm:$0xff]
    %v323 = vld [vmem:[#allocation5 + $0xa0] sm:$0xff]
    %v324 = vld [vmem:[#allocation5 + $0xa8] sm:$0xff]
    %v325 = vld [vmem:[#allocation5 + $0xb0] sm:$0x1]
    %v326 = vlaneseq
    %v327 = vshrl.u32 %v326, 7
    %v328 = vsub.s32 0, %v327
    %v329 = vrot.slane %v325, %v328
    %332 = vrot.lane.b32.xlu0 %v315, 64
    %v333 = vpop.permute.xlu0 %332
    %334 = vrot.lane.b32.xlu0 %v316, 64
    %v335 = vpop.permute.xlu0 %334
    %vm336 = vcmask 523264
    %v337 = vsel %vm336, %v333, 0
    %v339 = vsel %vm336, %v335, 0
    %341 = vmatprep.subr.mxu0 0.0
    %342 = vmatpush1.msra.mxu0 %v317
    %343 = vmatprep.subr.mxu0 0.0
    %344 = vmatpush1.msra.mxu0 %v318
    %345 = vmatprep.subr.mxu0 0.0
    %346 = vmatpush1.msra.mxu0 %v319
    %347 = vmatprep.subr.mxu0 0.0
    %348 = vmatpush1.msra.mxu0 %v320
    %349 = vmatprep.subr.mxu0 0.0
    %350 = vmatpush1.msra.mxu0 %v321
    %351 = vmatprep.subr.mxu0 0.0
    %352 = vmatpush1.msra.mxu0 %v322
    %353 = vmatprep.subr.mxu0 0.0
    %354 = vmatpush1.msra.mxu0 %v323
    %355 = vmatprep.subr.mxu0 0.0
    %356 = vmatpush1.msra.mxu0 %v324
    %357 = vmatprep.subr.mxu0 0.0
    %358 = vmatpush1.msra.mxu0 0.0
    %359 = vmatprep.subr.mxu0 0.0
    %360 = vmatpush1.msra.mxu0 0.0
    %361 = vmatprep.subr.mxu0 0.0
    %362 = vmatpush1.msra.mxu0 0.0
    %363 = vmatprep.subr.mxu0 0.0
    %364 = vmatpush1.msra.mxu0 0.0
    %365 = vmatprep.subr.mxu0 0.0
    %366 = vmatpush1.msra.mxu0 0.0
    %367 = vmatprep.subr.mxu0 0.0
    %368 = vmatpush1.msra.mxu0 0.0
    %369 = vmatprep.subr.mxu0 0.0
    %370 = vmatpush1.msra.mxu0 0.0
    %371 = vmatprep.subr.mxu0 0.0
    %372 = vmatpush1.msra.mxu0 0.0
    %373 = vmatprep.subr.mxu0 0.0
    %374 = vmatpush1.msra.mxu0 0.0
    %375 = vmatprep.subr.mxu0 0.0
    %376 = vmatpush1.msra.mxu0 0.0
    %377 = vmatprep.subr.mxu0 0.0
    %378 = vmatpush1.msra.mxu0 0.0
    %379 = vmatprep.subr.mxu0 0.0
    %380 = vmatpush1.msra.mxu0 0.0
    %381 = vmatprep.subr.mxu0 0.0
    %382 = vmatpush1.msra.mxu0 0.0
    %383 = vmatprep.subr.mxu0 0.0
    %384 = vmatpush1.msra.mxu0 0.0
    %385 = vmatprep.subr.mxu0 0.0
    %386 = vmatpush1.msra.mxu0 0.0
    %387 = vmatprep.subr.mxu0 0.0
    %388 = vmatpush1.msra.mxu0 0.0
    %389 = vmatprep.subr.mxu0 0.0
    %390 = vmatpush1.msra.mxu0 0.0
    %391 = vmatprep.subr.mxu0 0.0
    %392 = vmatpush1.msra.mxu0 0.0
    %393 = vmatprep.subr.mxu0 0.0
    %394 = vmatpush1.msra.mxu0 0.0
    %395 = vmatprep.subr.mxu0 0.0
    %396 = vmatpush1.msra.mxu0 0.0
    %397 = vmatprep.subr.mxu0 0.0
    %398 = vmatpush1.msra.mxu0 0.0
    %399 = vmatprep.subr.mxu0 0.0
    %400 = vmatpush1.msra.mxu0 0.0
    %401 = vmatprep.subr.mxu0 0.0
    %402 = vmatpush1.msra.mxu0 0.0
    %403 = vmatprep.subr.mxu0 0.0
    %404 = vmatpush1.msra.mxu0 0.0
    %405 = vmatprep.mubr.f32.mxu0 0.0
    %406 = vmatmul.mubr.f32.gmra.mrb[0].mxu0 %v337
    %v407 = vpop.f32.mrb[0].mxu0
    %v408 = vadd.f32 %v329, %v407
    %v409 = vpop.f32.mrb[0].mxu0
    %410 = vmatprep.mubr.f32.mxu0 0.0
    %411 = vmatmul.mubr.f32.gmra.mrb[0].mxu0 %v339
    %v412 = vpop.f32.mrb[0].mxu0
    %v413 = vadd.f32 %v329, %v412
    %v414 = vpop.f32.mrb[0].mxu0
    %415 = vdwg.mxu0
    %v416 = vmax.f32 %v408, 0.0
    %v417 = vmax.f32 %v413, 0.0
    %v418 = vld [vmem:[#allocation5 + $0xb8] sm:$0x1]
    %v419 = vlaneseq
    %v420 = vshrl.u32 %v419, 7
    %v421 = vsub.s32 0, %v420
    %v422 = vrot.slane %v418, %v421
    %v423 = vmul.f32 %v416, %v422
    %v424 = vmul.f32 %v417, %v422
    %vm425 = vcmask 130048
    %v426 = vsel %vm425, %v423, 0.0
    %427 = vadd.xlane.f32.xlu0 %v426
    %v428 = vpop.xlane.xlu0 %427
    %v429 = vsel %vm425, %v424, 0.0
    %430 = vadd.xlane.f32.xlu0 %v429
    %v431 = vpop.xlane.xlu0 %430
    %v432 = vxor.u32 %v428, 2147483648
    %v433 = vxor.u32 %v431, 2147483648
    %v434 = vmul.f32 %v432, 1.442695
    %v435 = vpow.pop %v434
    %v436 = vmul.f32 %v433, 1.442695
    %v437 = vpow.pop %v436
    %v438 = vadd.f32 %v435, 1.0
    %v439 = vadd.f32 %v437, 1.0
    %v440 = vrcp.pop %v438
    %v441 = vmul.f32 1.0, %v440
    %v442 = vrcp.pop %v439
    %v443 = vmul.f32 1.0, %v442
    %445 = vrot.lane.b32.xlu0 %v312, 16
    %v446 = vpop.permute.xlu0 %445
    %vm448 = vcmask 64512
    %v449 = vsel %vm448, %v307, %v441
    %vm450 = vcmask 72704
    %v451 = vsel %vm450, %v449, 0.0
    %v452 = vsel %vm425, %v451, %v446
    %vm453 = vcmask 195584
    %v454 = vsel %vm453, %v452, %v443
    %vm455 = vcmask 203776
    %v456 = vsel %vm455, %v454, 0.0
    %457 = vst.msk [vmem:[#allocation7] sm:$0xff] %vm141, %v456
    // Predicated region
    $region18: #{tpu_custom_call.1} parent=1 // pred_check
      _
    $region19: #{tpu_custom_call.1} parent=1 // pred_check_branch
      %459 = sbr.rel (0) target = $region21
    $region20: #{tpu_custom_call.1} parent=1 // pred_region
      %s461 = ssub.s32 128, 128
      %462 = vsyncadd [#allocation4], %s461
      %s464 = sshll.u32 [#allocation7], 4
      %s465 = int_to_ptr.vmem [resolvable:$true] %s464
      %467 = dma.vmem_to_hbm [thread:$0]  %s465, 128, %s2, [#allocation4]
    $region21: #{tpu_custom_call.1} parent=1 // pred_fallthru
      _
    // Predicated region
    $region22: #{tpu_custom_call.1} parent=1 // pred_check
      _
    $region23: #{tpu_custom_call.1} parent=1 // pred_check_branch
      %469 = sbr.rel (0) target = $region25
    $region24: #{tpu_custom_call.1} parent=1 // pred_region
      %470 = dma.done [#allocation4], 128
    $region25: #{tpu_custom_call.1} parent=1 // pred_fallthru
      _
    %471 = vsyncpa [#allocation3], 1
    %472 = vsyncpa [#allocation6], 1
    %473 = vsyncpa [#allocation4], 1

</llo_original>
